<compile_context>
chip_gen: v5e
topology: v5e:2x2
jax: 0.10.0
libtpu: 0.0.40
codegen_flags: <defaults>
</compile_context>

<pallas_src>
import functools

import jax
import jax.numpy as jnp
import numpy as np
from jax import lax
from jax.experimental import pallas as pl
from jax.experimental.pallas import tpu as pltpu


def _round_up(n, m):
    return ((n + m - 1) // m) * m


def _optionnet_kernel(x_ref, w4_ref, bc_ref, w1_ref, b1_ref, w2_ref, b2_ref,
                      mask_ref, out_ref, *, cin, width, ph_n, pw_n, cout):
    """One batch tile: x_ref (TB, H*W*Cin) -> out_ref (TB, 128)."""
    tb = x_ref.shape[0]
    ww = w4_ref.shape[0]                 # fused pool-window width = (3*W + 4)*Cin

    xv = x_ref[...]                      # (TB, H*W*Cin)  f32, loaded once
    w4 = w4_ref[...]                     # (WW, 4*Cout)   fused conv weight
    bc = bc_ref[...]                     # (1, Cout)      conv bias

    h1 = jnp.zeros((tb, b1_ref.shape[1]), jnp.float32)          # (TB, 64)
    for ph in range(ph_n):
        for pw in range(pw_n):
            base = (2 * ph * width + 2 * pw) * cin
            window = xv[:, base:base + ww]                       # (TB, WW)
            # the 4 conv outputs of this 2x2 pool cell, side by side on N:
            quads = jnp.dot(window, w4,
                            preferred_element_type=jnp.float32)  # (TB, 4*Cout)
            m = jnp.maximum(
                jnp.maximum(quads[:, 0 * cout:1 * cout],
                            quads[:, 1 * cout:2 * cout]),
                jnp.maximum(quads[:, 2 * cout:3 * cout],
                            quads[:, 3 * cout:4 * cout]))
            # bias + relu after the max: per-channel constant bias commutes with
            # max and relu is monotonic -> identical to relu(conv+bias) then pool.
            cell = jnp.maximum(m + bc, 0.0)                      # (TB, Cout)
            h1 = h1 + jnp.dot(cell, w1_ref[ph * pw_n + pw],
                              preferred_element_type=jnp.float32)
    h1 = jnp.maximum(h1 + b1_ref[...], 0.0)                      # (TB, 64)
    logits = jnp.dot(h1, w2_ref[...],
                     preferred_element_type=jnp.float32) + b2_ref[...]
    # full-tile, lane-dense masked-penalty + store (OD padded to 128 outside)
    out_ref[...] = logits - (1.0 - mask_ref[...]) * 100000000.0


def optionnet_forward(x, Wc, bc, W1, b1, W2, b2, mask):
    """x: (B, H, W, Cin) NHWC (the tensor the PyTorch module permutes itself)."""
    B, H, Wimg, Cin = x.shape
    Cout = Wc.shape[0]                   # 16
    OD = W2.shape[0]
    ODP = 128                            # lane-dense padded output width
    OH, OW = H - 2, Wimg - 2
    PH, PW = OH // 2, OW // 2            # 3, 3
    WW = (3 * Wimg + 4) * Cin            # fused 2x2-pool-window width (112)

    # ---------- weight glue (host side, tiny) ----------
    wt = np.asarray(Wc, np.float32).transpose(2, 3, 1, 0)        # (3,3,Cin,Cout)
    w4 = np.zeros((WW, 4 * Cout), np.float32)
    for q, (dy, dx) in enumerate(((0, 0), (0, 1), (1, 0), (1, 1))):
        for kh in range(3):
            for kw in range(3):
                r0 = ((dy + kh) * Wimg + (dx + kw)) * Cin
                w4[r0:r0 + Cin, q * Cout:(q + 1) * Cout] = wt[kh, kw]
    # fc1 weight regrouped per pooled cell, preserving PyTorch's c*9+ph*3+pw order
    w1_cells = (np.asarray(W1, np.float32).T
                .reshape(Cout, PH, PW, 64).transpose(1, 2, 0, 3)
                .reshape(PH * PW, Cout, 64))
    w2p = np.zeros((64, ODP), np.float32)
    w2p[:, :OD] = np.asarray(W2, np.float32).T
    b2p = np.zeros((1, ODP), np.float32)
    b2p[:, :OD] = np.asarray(b2, np.float32)

    # ---------- batch tiling / padding ----------
    TB = min(64, _round_up(B, 8))        # multiple of 8; 64 keeps vreg pressure low
    B_pad = _round_up(B, TB)
    x2 = jnp.pad(x.reshape(B, H * Wimg * Cin).astype(jnp.float32),
                 ((0, B_pad - B), (0, 0)))
    mask_p = jnp.pad(mask.astype(jnp.float32),
                     ((0, B_pad - B), (0, ODP - OD)), constant_values=1.0)

    kernel = functools.partial(_optionnet_kernel, cin=Cin, width=Wimg,
                               ph_n=PH, pw_n=PW, cout=Cout)

    out = pl.pallas_call(
        kernel,
        out_shape=jax.ShapeDtypeStruct((B_pad, ODP), jnp.float32),
        grid=(B_pad // TB,),
        in_specs=[
            pl.BlockSpec((TB, H * Wimg * Cin), lambda i: (i, 0)),   # x tile
            pl.BlockSpec(w4.shape, lambda i: (0, 0)),               # fused conv W
            pl.BlockSpec((1, Cout), lambda i: (0, 0)),              # conv bias
            pl.BlockSpec(w1_cells.shape, lambda i: (0, 0, 0)),      # fc1 (9,16,64)
            pl.BlockSpec((1, 64), lambda i: (0, 0)),                # fc1 bias
            pl.BlockSpec((64, ODP), lambda i: (0, 0)),              # fc2 W (padded)
            pl.BlockSpec((1, ODP), lambda i: (0, 0)),               # fc2 bias
            pl.BlockSpec((TB, ODP), lambda i: (i, 0)),              # mask tile
        ],
        out_specs=pl.BlockSpec((TB, ODP), lambda i: (i, 0)),
        compiler_params=pltpu.CompilerParams(
            dimension_semantics=("parallel",)),
    )(x2, jnp.asarray(w4), jnp.asarray(bc, jnp.float32).reshape(1, Cout),
      jnp.asarray(w1_cells), jnp.asarray(b1, jnp.float32).reshape(1, 64),
      jnp.asarray(w2p), jnp.asarray(b2p), mask_p)

    return out[:B, :OD]


def reference_forward(x, Wc, bc, W1, b1, W2, b2, mask):
    # Pure-JAX reference mirroring the PyTorch forward exactly.
    xn = jnp.transpose(x, (0, 3, 1, 2))                                  # NCHW
    y = lax.conv_general_dilated(xn, Wc, window_strides=(1, 1), padding='VALID',
                                 dimension_numbers=('NCHW', 'OIHW', 'NCHW'))
    y = jnp.maximum(y + bc[None, :, None, None], 0.0)                    # (B,16,6,6)
    B = y.shape[0]
    y = y.reshape(B, 16, 3, 2, 3, 2).max(axis=(3, 5))                    # (B,16,3,3)
    y = y.reshape(B, 16 * 3 * 3)
    y = jnp.maximum(y @ W1.T + b1, 0.0)
    y = y @ W2.T + b2
    y = y - (1.0 - mask) * 100000000.0
    return y


if __name__ == "__main__":
    B, H, W, Cin, OD = 2, 8, 8, 4, 8   # H=W=8 -> conv 6x6 -> pool 3x3 -> 16*3*3=144
    key = jax.random.PRNGKey(0)
    ks = jax.random.split(key, 8)

    def u(k, shape, fan_in):
        bound = 1.0 / float(fan_in) ** 0.5
        return jax.random.uniform(k, shape, jnp.float32, -bound, bound)

    # PyTorch-native parameter shapes, deterministic init
    Wc = u(ks[0], (16, Cin, 3, 3), Cin * 9)   # Conv2d(Cin, 16, 3)
    bc = u(ks[1], (16,), Cin * 9)
    W1 = u(ks[2], (64, 144), 144)             # Linear(144, 64)
    b1 = u(ks[3], (64,), 144)
    W2 = u(ks[4], (OD, 64), 64)               # Linear(64, OD)
    b2 = u(ks[5], (OD,), 64)

    x = jax.random.normal(ks[6], (B, H, W, Cin), jnp.float32)            # NHWC input
    mask = (jax.random.uniform(ks[7], (B, OD)) > 0.3).astype(jnp.float32)

    out = optionnet_forward(x, Wc, bc, W1, b1, W2, b2, mask)
    out = jax.block_until_ready(out)

    ref = reference_forward(x, Wc, bc, W1, b1, W2, b2, mask)
    if not bool(jnp.allclose(out, ref, rtol=1e-4, atol=1e-2)):
        raise AssertionError(
            f"mismatch vs reference, max abs diff = {float(jnp.max(jnp.abs(out - ref)))}")
    print("KERNEL_OK")
</pallas_src>

<mosaic_0001>
module attributes {stable_mosaic.version = 11 : i64} {
  func.func @_optionnet_kernel(%arg0: i32, %arg1: memref<8x256xf32, #tpu.memory_space<vmem>>, %arg2: memref<112x64xf32, #tpu.memory_space<vmem>>, %arg3: memref<1x16xf32, #tpu.memory_space<vmem>>, %arg4: memref<9x16x64xf32, #tpu.memory_space<vmem>>, %arg5: memref<1x64xf32, #tpu.memory_space<vmem>>, %arg6: memref<64x128xf32, #tpu.memory_space<vmem>>, %arg7: memref<1x128xf32, #tpu.memory_space<vmem>>, %arg8: memref<8x128xf32, #tpu.memory_space<vmem>>, %arg9: memref<8x128xf32, #tpu.memory_space<vmem>>) attributes {dimension_semantics = [#tpu.dimension_semantics<parallel>], iteration_bounds = array<i64: 1>, scalar_prefetch = 0 : i64, scratch_operands = 0 : i64, tpu.core_type = #tpu.core_type<tc>, window_params = [{transform_indices = @transform_0, window_bounds = array<i64: 8, 256>}, {pipeline_mode = #tpu.pipeline_mode<synchronous>, transform_indices = @transform_1, window_bounds = array<i64: 112, 64>}, {pipeline_mode = #tpu.pipeline_mode<synchronous>, transform_indices = @transform_2, window_bounds = array<i64: 1, 16>}, {pipeline_mode = #tpu.pipeline_mode<synchronous>, transform_indices = @transform_3, window_bounds = array<i64: 9, 16, 64>}, {pipeline_mode = #tpu.pipeline_mode<synchronous>, transform_indices = @transform_4, window_bounds = array<i64: 1, 64>}, {pipeline_mode = #tpu.pipeline_mode<synchronous>, transform_indices = @transform_5, window_bounds = array<i64: 64, 128>}, {pipeline_mode = #tpu.pipeline_mode<synchronous>, transform_indices = @transform_6, window_bounds = array<i64: 1, 128>}, {transform_indices = @transform_7, window_bounds = array<i64: 8, 128>}, {transform_indices = @transform_8, window_bounds = array<i64: 8, 128>}]} {
    %c0 = arith.constant 0 : index
    %c0_0 = arith.constant 0 : index
    %0 = vector.load %arg1[%c0, %c0_0] : memref<8x256xf32, #tpu.memory_space<vmem>>, vector<8x256xf32>
    %c0_1 = arith.constant 0 : index
    %c0_2 = arith.constant 0 : index
    %1 = vector.load %arg2[%c0_1, %c0_2] : memref<112x64xf32, #tpu.memory_space<vmem>>, vector<112x64xf32>
    %c0_3 = arith.constant 0 : index
    %c0_4 = arith.constant 0 : index
    %2 = vector.load %arg3[%c0_3, %c0_4] : memref<1x16xf32, #tpu.memory_space<vmem>>, vector<1x16xf32>
    %cst = arith.constant 0.000000e+00 : f32
    %3 = vector.broadcast %cst : f32 to vector<8x64xf32>
    %4 = vector.extract_strided_slice %0 {offsets = [0, 0], sizes = [8, 112], strides = [1, 1]} : vector<8x256xf32> to vector<8x112xf32>
    %cst_5 = arith.constant dense<0.000000e+00> : vector<8x64xf32>
    %5 = tpu.matmul %4, %1, %cst_5 {dimension_numbers = #tpu.dot_dimension_numbers<[1], [0], [0], [1], [0, 0, 1, 1], [], []>} : vector<8x112xf32>, vector<112x64xf32>, vector<8x64xf32> -> vector<8x64xf32>
    %6 = vector.extract_strided_slice %5 {offsets = [0, 0], sizes = [8, 16], strides = [1, 1]} : vector<8x64xf32> to vector<8x16xf32>
    %7 = vector.extract_strided_slice %5 {offsets = [0, 16], sizes = [8, 16], strides = [1, 1]} : vector<8x64xf32> to vector<8x16xf32>
    %8 = arith.maximumf %6, %7 : vector<8x16xf32>
    %9 = vector.extract_strided_slice %5 {offsets = [0, 32], sizes = [8, 16], strides = [1, 1]} : vector<8x64xf32> to vector<8x16xf32>
    %10 = vector.extract_strided_slice %5 {offsets = [0, 48], sizes = [8, 16], strides = [1, 1]} : vector<8x64xf32> to vector<8x16xf32>
    %11 = arith.maximumf %9, %10 : vector<8x16xf32>
    %12 = arith.maximumf %8, %11 : vector<8x16xf32>
    %13 = vector.broadcast %2 : vector<1x16xf32> to vector<8x16xf32>
    %14 = arith.addf %12, %13 : vector<8x16xf32>
    %cst_6 = arith.constant 0.000000e+00 : f32
    %15 = vector.broadcast %cst_6 : f32 to vector<8x16xf32>
    %16 = arith.maximumf %14, %15 : vector<8x16xf32>
    %c0_7 = arith.constant 0 : index
    %c0_8 = arith.constant 0 : index
    %c0_9 = arith.constant 0 : index
    %17 = vector.load %arg4[%c0_7, %c0_8, %c0_9] : memref<9x16x64xf32, #tpu.memory_space<vmem>>, vector<1x16x64xf32>
    %18 = vector.shape_cast %17 : vector<1x16x64xf32> to vector<16x64xf32>
    %cst_10 = arith.constant dense<0.000000e+00> : vector<8x64xf32>
    %19 = tpu.matmul %16, %18, %cst_10 {dimension_numbers = #tpu.dot_dimension_numbers<[1], [0], [0], [1], [0, 0, 1, 1], [], []>} : vector<8x16xf32>, vector<16x64xf32>, vector<8x64xf32> -> vector<8x64xf32>
    %20 = arith.addf %3, %19 : vector<8x64xf32>
    %21 = vector.extract_strided_slice %0 {offsets = [0, 8], sizes = [8, 112], strides = [1, 1]} : vector<8x256xf32> to vector<8x112xf32>
    %cst_11 = arith.constant dense<0.000000e+00> : vector<8x64xf32>
    %22 = tpu.matmul %21, %1, %cst_11 {dimension_numbers = #tpu.dot_dimension_numbers<[1], [0], [0], [1], [0, 0, 1, 1], [], []>} : vector<8x112xf32>, vector<112x64xf32>, vector<8x64xf32> -> vector<8x64xf32>
    %23 = vector.extract_strided_slice %22 {offsets = [0, 0], sizes = [8, 16], strides = [1, 1]} : vector<8x64xf32> to vector<8x16xf32>
    %24 = vector.extract_strided_slice %22 {offsets = [0, 16], sizes = [8, 16], strides = [1, 1]} : vector<8x64xf32> to vector<8x16xf32>
    %25 = arith.maximumf %23, %24 : vector<8x16xf32>
    %26 = vector.extract_strided_slice %22 {offsets = [0, 32], sizes = [8, 16], strides = [1, 1]} : vector<8x64xf32> to vector<8x16xf32>
    %27 = vector.extract_strided_slice %22 {offsets = [0, 48], sizes = [8, 16], strides = [1, 1]} : vector<8x64xf32> to vector<8x16xf32>
    %28 = arith.maximumf %26, %27 : vector<8x16xf32>
    %29 = arith.maximumf %25, %28 : vector<8x16xf32>
    %30 = vector.broadcast %2 : vector<1x16xf32> to vector<8x16xf32>
    %31 = arith.addf %29, %30 : vector<8x16xf32>
    %cst_12 = arith.constant 0.000000e+00 : f32
    %32 = vector.broadcast %cst_12 : f32 to vector<8x16xf32>
    %33 = arith.maximumf %31, %32 : vector<8x16xf32>
    %c1 = arith.constant 1 : index
    %c0_13 = arith.constant 0 : index
    %c0_14 = arith.constant 0 : index
    %34 = vector.load %arg4[%c1, %c0_13, %c0_14] : memref<9x16x64xf32, #tpu.memory_space<vmem>>, vector<1x16x64xf32>
    %35 = vector.shape_cast %34 : vector<1x16x64xf32> to vector<16x64xf32>
    %cst_15 = arith.constant dense<0.000000e+00> : vector<8x64xf32>
    %36 = tpu.matmul %33, %35, %cst_15 {dimension_numbers = #tpu.dot_dimension_numbers<[1], [0], [0], [1], [0, 0, 1, 1], [], []>} : vector<8x16xf32>, vector<16x64xf32>, vector<8x64xf32> -> vector<8x64xf32>
    %37 = arith.addf %20, %36 : vector<8x64xf32>
    %38 = vector.extract_strided_slice %0 {offsets = [0, 16], sizes = [8, 112], strides = [1, 1]} : vector<8x256xf32> to vector<8x112xf32>
    %cst_16 = arith.constant dense<0.000000e+00> : vector<8x64xf32>
    %39 = tpu.matmul %38, %1, %cst_16 {dimension_numbers = #tpu.dot_dimension_numbers<[1], [0], [0], [1], [0, 0, 1, 1], [], []>} : vector<8x112xf32>, vector<112x64xf32>, vector<8x64xf32> -> vector<8x64xf32>
    %40 = vector.extract_strided_slice %39 {offsets = [0, 0], sizes = [8, 16], strides = [1, 1]} : vector<8x64xf32> to vector<8x16xf32>
    %41 = vector.extract_strided_slice %39 {offsets = [0, 16], sizes = [8, 16], strides = [1, 1]} : vector<8x64xf32> to vector<8x16xf32>
    %42 = arith.maximumf %40, %41 : vector<8x16xf32>
    %43 = vector.extract_strided_slice %39 {offsets = [0, 32], sizes = [8, 16], strides = [1, 1]} : vector<8x64xf32> to vector<8x16xf32>
    %44 = vector.extract_strided_slice %39 {offsets = [0, 48], sizes = [8, 16], strides = [1, 1]} : vector<8x64xf32> to vector<8x16xf32>
    %45 = arith.maximumf %43, %44 : vector<8x16xf32>
    %46 = arith.maximumf %42, %45 : vector<8x16xf32>
    %47 = vector.broadcast %2 : vector<1x16xf32> to vector<8x16xf32>
    %48 = arith.addf %46, %47 : vector<8x16xf32>
    %cst_17 = arith.constant 0.000000e+00 : f32
    %49 = vector.broadcast %cst_17 : f32 to vector<8x16xf32>
    %50 = arith.maximumf %48, %49 : vector<8x16xf32>
    %c2 = arith.constant 2 : index
    %c0_18 = arith.constant 0 : index
    %c0_19 = arith.constant 0 : index
    %51 = vector.load %arg4[%c2, %c0_18, %c0_19] : memref<9x16x64xf32, #tpu.memory_space<vmem>>, vector<1x16x64xf32>
    %52 = vector.shape_cast %51 : vector<1x16x64xf32> to vector<16x64xf32>
    %cst_20 = arith.constant dense<0.000000e+00> : vector<8x64xf32>
    %53 = tpu.matmul %50, %52, %cst_20 {dimension_numbers = #tpu.dot_dimension_numbers<[1], [0], [0], [1], [0, 0, 1, 1], [], []>} : vector<8x16xf32>, vector<16x64xf32>, vector<8x64xf32> -> vector<8x64xf32>
    %54 = arith.addf %37, %53 : vector<8x64xf32>
    %55 = vector.extract_strided_slice %0 {offsets = [0, 64], sizes = [8, 112], strides = [1, 1]} : vector<8x256xf32> to vector<8x112xf32>
    %cst_21 = arith.constant dense<0.000000e+00> : vector<8x64xf32>
    %56 = tpu.matmul %55, %1, %cst_21 {dimension_numbers = #tpu.dot_dimension_numbers<[1], [0], [0], [1], [0, 0, 1, 1], [], []>} : vector<8x112xf32>, vector<112x64xf32>, vector<8x64xf32> -> vector<8x64xf32>
    %57 = vector.extract_strided_slice %56 {offsets = [0, 0], sizes = [8, 16], strides = [1, 1]} : vector<8x64xf32> to vector<8x16xf32>
    %58 = vector.extract_strided_slice %56 {offsets = [0, 16], sizes = [8, 16], strides = [1, 1]} : vector<8x64xf32> to vector<8x16xf32>
    %59 = arith.maximumf %57, %58 : vector<8x16xf32>
    %60 = vector.extract_strided_slice %56 {offsets = [0, 32], sizes = [8, 16], strides = [1, 1]} : vector<8x64xf32> to vector<8x16xf32>
    %61 = vector.extract_strided_slice %56 {offsets = [0, 48], sizes = [8, 16], strides = [1, 1]} : vector<8x64xf32> to vector<8x16xf32>
    %62 = arith.maximumf %60, %61 : vector<8x16xf32>
    %63 = arith.maximumf %59, %62 : vector<8x16xf32>
    %64 = vector.broadcast %2 : vector<1x16xf32> to vector<8x16xf32>
    %65 = arith.addf %63, %64 : vector<8x16xf32>
    %cst_22 = arith.constant 0.000000e+00 : f32
    %66 = vector.broadcast %cst_22 : f32 to vector<8x16xf32>
    %67 = arith.maximumf %65, %66 : vector<8x16xf32>
    %c3 = arith.constant 3 : index
    %c0_23 = arith.constant 0 : index
    %c0_24 = arith.constant 0 : index
    %68 = vector.load %arg4[%c3, %c0_23, %c0_24] : memref<9x16x64xf32, #tpu.memory_space<vmem>>, vector<1x16x64xf32>
    %69 = vector.shape_cast %68 : vector<1x16x64xf32> to vector<16x64xf32>
    %cst_25 = arith.constant dense<0.000000e+00> : vector<8x64xf32>
    %70 = tpu.matmul %67, %69, %cst_25 {dimension_numbers = #tpu.dot_dimension_numbers<[1], [0], [0], [1], [0, 0, 1, 1], [], []>} : vector<8x16xf32>, vector<16x64xf32>, vector<8x64xf32> -> vector<8x64xf32>
    %71 = arith.addf %54, %70 : vector<8x64xf32>
    %72 = vector.extract_strided_slice %0 {offsets = [0, 72], sizes = [8, 112], strides = [1, 1]} : vector<8x256xf32> to vector<8x112xf32>
    %cst_26 = arith.constant dense<0.000000e+00> : vector<8x64xf32>
    %73 = tpu.matmul %72, %1, %cst_26 {dimension_numbers = #tpu.dot_dimension_numbers<[1], [0], [0], [1], [0, 0, 1, 1], [], []>} : vector<8x112xf32>, vector<112x64xf32>, vector<8x64xf32> -> vector<8x64xf32>
    %74 = vector.extract_strided_slice %73 {offsets = [0, 0], sizes = [8, 16], strides = [1, 1]} : vector<8x64xf32> to vector<8x16xf32>
    %75 = vector.extract_strided_slice %73 {offsets = [0, 16], sizes = [8, 16], strides = [1, 1]} : vector<8x64xf32> to vector<8x16xf32>
    %76 = arith.maximumf %74, %75 : vector<8x16xf32>
    %77 = vector.extract_strided_slice %73 {offsets = [0, 32], sizes = [8, 16], strides = [1, 1]} : vector<8x64xf32> to vector<8x16xf32>
    %78 = vector.extract_strided_slice %73 {offsets = [0, 48], sizes = [8, 16], strides = [1, 1]} : vector<8x64xf32> to vector<8x16xf32>
    %79 = arith.maximumf %77, %78 : vector<8x16xf32>
    %80 = arith.maximumf %76, %79 : vector<8x16xf32>
    %81 = vector.broadcast %2 : vector<1x16xf32> to vector<8x16xf32>
    %82 = arith.addf %80, %81 : vector<8x16xf32>
    %cst_27 = arith.constant 0.000000e+00 : f32
    %83 = vector.broadcast %cst_27 : f32 to vector<8x16xf32>
    %84 = arith.maximumf %82, %83 : vector<8x16xf32>
    %c4 = arith.constant 4 : index
    %c0_28 = arith.constant 0 : index
    %c0_29 = arith.constant 0 : index
    %85 = vector.load %arg4[%c4, %c0_28, %c0_29] : memref<9x16x64xf32, #tpu.memory_space<vmem>>, vector<1x16x64xf32>
    %86 = vector.shape_cast %85 : vector<1x16x64xf32> to vector<16x64xf32>
    %cst_30 = arith.constant dense<0.000000e+00> : vector<8x64xf32>
    %87 = tpu.matmul %84, %86, %cst_30 {dimension_numbers = #tpu.dot_dimension_numbers<[1], [0], [0], [1], [0, 0, 1, 1], [], []>} : vector<8x16xf32>, vector<16x64xf32>, vector<8x64xf32> -> vector<8x64xf32>
    %88 = arith.addf %71, %87 : vector<8x64xf32>
    %89 = vector.extract_strided_slice %0 {offsets = [0, 80], sizes = [8, 112], strides = [1, 1]} : vector<8x256xf32> to vector<8x112xf32>
    %cst_31 = arith.constant dense<0.000000e+00> : vector<8x64xf32>
    %90 = tpu.matmul %89, %1, %cst_31 {dimension_numbers = #tpu.dot_dimension_numbers<[1], [0], [0], [1], [0, 0, 1, 1], [], []>} : vector<8x112xf32>, vector<112x64xf32>, vector<8x64xf32> -> vector<8x64xf32>
    %91 = vector.extract_strided_slice %90 {offsets = [0, 0], sizes = [8, 16], strides = [1, 1]} : vector<8x64xf32> to vector<8x16xf32>
    %92 = vector.extract_strided_slice %90 {offsets = [0, 16], sizes = [8, 16], strides = [1, 1]} : vector<8x64xf32> to vector<8x16xf32>
    %93 = arith.maximumf %91, %92 : vector<8x16xf32>
    %94 = vector.extract_strided_slice %90 {offsets = [0, 32], sizes = [8, 16], strides = [1, 1]} : vector<8x64xf32> to vector<8x16xf32>
    %95 = vector.extract_strided_slice %90 {offsets = [0, 48], sizes = [8, 16], strides = [1, 1]} : vector<8x64xf32> to vector<8x16xf32>
    %96 = arith.maximumf %94, %95 : vector<8x16xf32>
    %97 = arith.maximumf %93, %96 : vector<8x16xf32>
    %98 = vector.broadcast %2 : vector<1x16xf32> to vector<8x16xf32>
    %99 = arith.addf %97, %98 : vector<8x16xf32>
    %cst_32 = arith.constant 0.000000e+00 : f32
    %100 = vector.broadcast %cst_32 : f32 to vector<8x16xf32>
    %101 = arith.maximumf %99, %100 : vector<8x16xf32>
    %c5 = arith.constant 5 : index
    %c0_33 = arith.constant 0 : index
    %c0_34 = arith.constant 0 : index
    %102 = vector.load %arg4[%c5, %c0_33, %c0_34] : memref<9x16x64xf32, #tpu.memory_space<vmem>>, vector<1x16x64xf32>
    %103 = vector.shape_cast %102 : vector<1x16x64xf32> to vector<16x64xf32>
    %cst_35 = arith.constant dense<0.000000e+00> : vector<8x64xf32>
    %104 = tpu.matmul %101, %103, %cst_35 {dimension_numbers = #tpu.dot_dimension_numbers<[1], [0], [0], [1], [0, 0, 1, 1], [], []>} : vector<8x16xf32>, vector<16x64xf32>, vector<8x64xf32> -> vector<8x64xf32>
    %105 = arith.addf %88, %104 : vector<8x64xf32>
    %106 = vector.extract_strided_slice %0 {offsets = [0, 128], sizes = [8, 112], strides = [1, 1]} : vector<8x256xf32> to vector<8x112xf32>
    %cst_36 = arith.constant dense<0.000000e+00> : vector<8x64xf32>
    %107 = tpu.matmul %106, %1, %cst_36 {dimension_numbers = #tpu.dot_dimension_numbers<[1], [0], [0], [1], [0, 0, 1, 1], [], []>} : vector<8x112xf32>, vector<112x64xf32>, vector<8x64xf32> -> vector<8x64xf32>
    %108 = vector.extract_strided_slice %107 {offsets = [0, 0], sizes = [8, 16], strides = [1, 1]} : vector<8x64xf32> to vector<8x16xf32>
    %109 = vector.extract_strided_slice %107 {offsets = [0, 16], sizes = [8, 16], strides = [1, 1]} : vector<8x64xf32> to vector<8x16xf32>
    %110 = arith.maximumf %108, %109 : vector<8x16xf32>
    %111 = vector.extract_strided_slice %107 {offsets = [0, 32], sizes = [8, 16], strides = [1, 1]} : vector<8x64xf32> to vector<8x16xf32>
    %112 = vector.extract_strided_slice %107 {offsets = [0, 48], sizes = [8, 16], strides = [1, 1]} : vector<8x64xf32> to vector<8x16xf32>
    %113 = arith.maximumf %111, %112 : vector<8x16xf32>
    %114 = arith.maximumf %110, %113 : vector<8x16xf32>
    %115 = vector.broadcast %2 : vector<1x16xf32> to vector<8x16xf32>
    %116 = arith.addf %114, %115 : vector<8x16xf32>
    %cst_37 = arith.constant 0.000000e+00 : f32
    %117 = vector.broadcast %cst_37 : f32 to vector<8x16xf32>
    %118 = arith.maximumf %116, %117 : vector<8x16xf32>
    %c6 = arith.constant 6 : index
    %c0_38 = arith.constant 0 : index
    %c0_39 = arith.constant 0 : index
    %119 = vector.load %arg4[%c6, %c0_38, %c0_39] : memref<9x16x64xf32, #tpu.memory_space<vmem>>, vector<1x16x64xf32>
    %120 = vector.shape_cast %119 : vector<1x16x64xf32> to vector<16x64xf32>
    %cst_40 = arith.constant dense<0.000000e+00> : vector<8x64xf32>
    %121 = tpu.matmul %118, %120, %cst_40 {dimension_numbers = #tpu.dot_dimension_numbers<[1], [0], [0], [1], [0, 0, 1, 1], [], []>} : vector<8x16xf32>, vector<16x64xf32>, vector<8x64xf32> -> vector<8x64xf32>
    %122 = arith.addf %105, %121 : vector<8x64xf32>
    %123 = vector.extract_strided_slice %0 {offsets = [0, 136], sizes = [8, 112], strides = [1, 1]} : vector<8x256xf32> to vector<8x112xf32>
    %cst_41 = arith.constant dense<0.000000e+00> : vector<8x64xf32>
    %124 = tpu.matmul %123, %1, %cst_41 {dimension_numbers = #tpu.dot_dimension_numbers<[1], [0], [0], [1], [0, 0, 1, 1], [], []>} : vector<8x112xf32>, vector<112x64xf32>, vector<8x64xf32> -> vector<8x64xf32>
    %125 = vector.extract_strided_slice %124 {offsets = [0, 0], sizes = [8, 16], strides = [1, 1]} : vector<8x64xf32> to vector<8x16xf32>
    %126 = vector.extract_strided_slice %124 {offsets = [0, 16], sizes = [8, 16], strides = [1, 1]} : vector<8x64xf32> to vector<8x16xf32>
    %127 = arith.maximumf %125, %126 : vector<8x16xf32>
    %128 = vector.extract_strided_slice %124 {offsets = [0, 32], sizes = [8, 16], strides = [1, 1]} : vector<8x64xf32> to vector<8x16xf32>
    %129 = vector.extract_strided_slice %124 {offsets = [0, 48], sizes = [8, 16], strides = [1, 1]} : vector<8x64xf32> to vector<8x16xf32>
    %130 = arith.maximumf %128, %129 : vector<8x16xf32>
    %131 = arith.maximumf %127, %130 : vector<8x16xf32>
    %132 = vector.broadcast %2 : vector<1x16xf32> to vector<8x16xf32>
    %133 = arith.addf %131, %132 : vector<8x16xf32>
    %cst_42 = arith.constant 0.000000e+00 : f32
    %134 = vector.broadcast %cst_42 : f32 to vector<8x16xf32>
    %135 = arith.maximumf %133, %134 : vector<8x16xf32>
    %c7 = arith.constant 7 : index
    %c0_43 = arith.constant 0 : index
    %c0_44 = arith.constant 0 : index
    %136 = vector.load %arg4[%c7, %c0_43, %c0_44] : memref<9x16x64xf32, #tpu.memory_space<vmem>>, vector<1x16x64xf32>
    %137 = vector.shape_cast %136 : vector<1x16x64xf32> to vector<16x64xf32>
    %cst_45 = arith.constant dense<0.000000e+00> : vector<8x64xf32>
    %138 = tpu.matmul %135, %137, %cst_45 {dimension_numbers = #tpu.dot_dimension_numbers<[1], [0], [0], [1], [0, 0, 1, 1], [], []>} : vector<8x16xf32>, vector<16x64xf32>, vector<8x64xf32> -> vector<8x64xf32>
    %139 = arith.addf %122, %138 : vector<8x64xf32>
    %140 = vector.extract_strided_slice %0 {offsets = [0, 144], sizes = [8, 112], strides = [1, 1]} : vector<8x256xf32> to vector<8x112xf32>
    %cst_46 = arith.constant dense<0.000000e+00> : vector<8x64xf32>
    %141 = tpu.matmul %140, %1, %cst_46 {dimension_numbers = #tpu.dot_dimension_numbers<[1], [0], [0], [1], [0, 0, 1, 1], [], []>} : vector<8x112xf32>, vector<112x64xf32>, vector<8x64xf32> -> vector<8x64xf32>
    %142 = vector.extract_strided_slice %141 {offsets = [0, 0], sizes = [8, 16], strides = [1, 1]} : vector<8x64xf32> to vector<8x16xf32>
    %143 = vector.extract_strided_slice %141 {offsets = [0, 16], sizes = [8, 16], strides = [1, 1]} : vector<8x64xf32> to vector<8x16xf32>
    %144 = arith.maximumf %142, %143 : vector<8x16xf32>
    %145 = vector.extract_strided_slice %141 {offsets = [0, 32], sizes = [8, 16], strides = [1, 1]} : vector<8x64xf32> to vector<8x16xf32>
    %146 = vector.extract_strided_slice %141 {offsets = [0, 48], sizes = [8, 16], strides = [1, 1]} : vector<8x64xf32> to vector<8x16xf32>
    %147 = arith.maximumf %145, %146 : vector<8x16xf32>
    %148 = arith.maximumf %144, %147 : vector<8x16xf32>
    %149 = vector.broadcast %2 : vector<1x16xf32> to vector<8x16xf32>
    %150 = arith.addf %148, %149 : vector<8x16xf32>
    %cst_47 = arith.constant 0.000000e+00 : f32
    %151 = vector.broadcast %cst_47 : f32 to vector<8x16xf32>
    %152 = arith.maximumf %150, %151 : vector<8x16xf32>
    %c8 = arith.constant 8 : index
    %c0_48 = arith.constant 0 : index
    %c0_49 = arith.constant 0 : index
    %153 = vector.load %arg4[%c8, %c0_48, %c0_49] : memref<9x16x64xf32, #tpu.memory_space<vmem>>, vector<1x16x64xf32>
    %154 = vector.shape_cast %153 : vector<1x16x64xf32> to vector<16x64xf32>
    %cst_50 = arith.constant dense<0.000000e+00> : vector<8x64xf32>
    %155 = tpu.matmul %152, %154, %cst_50 {dimension_numbers = #tpu.dot_dimension_numbers<[1], [0], [0], [1], [0, 0, 1, 1], [], []>} : vector<8x16xf32>, vector<16x64xf32>, vector<8x64xf32> -> vector<8x64xf32>
    %156 = arith.addf %139, %155 : vector<8x64xf32>
    %c0_51 = arith.constant 0 : index
    %c0_52 = arith.constant 0 : index
    %157 = vector.load %arg5[%c0_51, %c0_52] : memref<1x64xf32, #tpu.memory_space<vmem>>, vector<1x64xf32>
    %158 = vector.broadcast %157 : vector<1x64xf32> to vector<8x64xf32>
    %159 = arith.addf %156, %158 : vector<8x64xf32>
    %cst_53 = arith.constant 0.000000e+00 : f32
    %160 = vector.broadcast %cst_53 : f32 to vector<8x64xf32>
    %161 = arith.maximumf %159, %160 : vector<8x64xf32>
    %c0_54 = arith.constant 0 : index
    %c0_55 = arith.constant 0 : index
    %162 = vector.load %arg6[%c0_54, %c0_55] : memref<64x128xf32, #tpu.memory_space<vmem>>, vector<64x128xf32>
    %cst_56 = arith.constant dense<0.000000e+00> : vector<8x128xf32>
    %163 = tpu.matmul %161, %162, %cst_56 {dimension_numbers = #tpu.dot_dimension_numbers<[1], [0], [0], [1], [0, 0, 1, 1], [], []>} : vector<8x64xf32>, vector<64x128xf32>, vector<8x128xf32> -> vector<8x128xf32>
    %c0_57 = arith.constant 0 : index
    %c0_58 = arith.constant 0 : index
    %164 = vector.load %arg7[%c0_57, %c0_58] : memref<1x128xf32, #tpu.memory_space<vmem>>, vector<1x128xf32>
    %165 = vector.broadcast %164 : vector<1x128xf32> to vector<8x128xf32>
    %166 = arith.addf %163, %165 : vector<8x128xf32>
    %c0_59 = arith.constant 0 : index
    %c0_60 = arith.constant 0 : index
    %167 = vector.load %arg8[%c0_59, %c0_60] : memref<8x128xf32, #tpu.memory_space<vmem>>, vector<8x128xf32>
    %cst_61 = arith.constant 1.000000e+00 : f32
    %168 = vector.broadcast %cst_61 : f32 to vector<8x128xf32>
    %169 = arith.subf %168, %167 : vector<8x128xf32>
    %cst_62 = arith.constant 1.000000e+08 : f32
    %170 = vector.broadcast %cst_62 : f32 to vector<8x128xf32>
    %171 = arith.mulf %169, %170 : vector<8x128xf32>
    %172 = arith.subf %166, %171 : vector<8x128xf32>
    %c0_63 = arith.constant 0 : index
    %c0_64 = arith.constant 0 : index
    %173 = vector.load %arg9[%c0_63, %c0_64] : memref<8x128xf32, #tpu.memory_space<vmem>>, vector<8x128xf32>
    tpu.vector_store %arg9[%c0_63, %c0_64], %172 {strides = array<i32>} : memref<8x128xf32, #tpu.memory_space<vmem>>, vector<8x128xf32>,
    return
  }
  func.func @transform_0(%arg0: i32) -> (i32, i32) {
    %c0_i32 = arith.constant 0 : i32
    %c0_i32_0 = arith.constant 0 : i32
    return %arg0, %c0_i32 : i32, i32
  }
  func.func @transform_1(%arg0: i32) -> (i32, i32) {
    %c0_i32 = arith.constant 0 : i32
    %c0_i32_0 = arith.constant 0 : i32
    %c0_i32_1 = arith.constant 0 : i32
    return %c0_i32, %c0_i32_0 : i32, i32
  }
  func.func @transform_2(%arg0: i32) -> (i32, i32) {
    %c0_i32 = arith.constant 0 : i32
    %c0_i32_0 = arith.constant 0 : i32
    %c0_i32_1 = arith.constant 0 : i32
    return %c0_i32, %c0_i32_0 : i32, i32
  }
  func.func @transform_3(%arg0: i32) -> (i32, i32, i32) {
    %c0_i32 = arith.constant 0 : i32
    %c0_i32_0 = arith.constant 0 : i32
    %c0_i32_1 = arith.constant 0 : i32
    %c0_i32_2 = arith.constant 0 : i32
    return %c0_i32, %c0_i32_0, %c0_i32_1 : i32, i32, i32
  }
  func.func @transform_4(%arg0: i32) -> (i32, i32) {
    %c0_i32 = arith.constant 0 : i32
    %c0_i32_0 = arith.constant 0 : i32
    %c0_i32_1 = arith.constant 0 : i32
    return %c0_i32, %c0_i32_0 : i32, i32
  }
  func.func @transform_5(%arg0: i32) -> (i32, i32) {
    %c0_i32 = arith.constant 0 : i32
    %c0_i32_0 = arith.constant 0 : i32
    %c0_i32_1 = arith.constant 0 : i32
    return %c0_i32, %c0_i32_0 : i32, i32
  }
  func.func @transform_6(%arg0: i32) -> (i32, i32) {
    %c0_i32 = arith.constant 0 : i32
    %c0_i32_0 = arith.constant 0 : i32
    %c0_i32_1 = arith.constant 0 : i32
    return %c0_i32, %c0_i32_0 : i32, i32
  }
  func.func @transform_7(%arg0: i32) -> (i32, i32) {
    %c0_i32 = arith.constant 0 : i32
    %c0_i32_0 = arith.constant 0 : i32
    return %arg0, %c0_i32 : i32, i32
  }
  func.func @transform_8(%arg0: i32) -> (i32, i32) {
    %c0_i32 = arith.constant 0 : i32
    %c0_i32_0 = arith.constant 0 : i32
    return %arg0, %c0_i32 : i32, i32
  }
}

</mosaic_0001>

<llo_original>
// kernel: tpu_custom_call.1
$region0: #{tpu_custom_call.1}
  #allocation0 [shape = 'u32[]', space=smem, size = 0x4, offset = 0x4, fixed_abs, tag = 'smem constant byte address 0x4 - core index']
  #allocation1 [shape = 'u32[72,128]{1,0:T(1,128)}', space=vmem, size = 0x9000, scoped, tag = 'internal scratch']
  %s0 = inlined_call_operand.vmem [shape: f32[8,256], index: 0, kind: input, shape index: {}]
  %s1 = inlined_call_operand.vmem [shape: f32[112,64], index: 1, kind: input, shape index: {}]
  %s2 = inlined_call_operand.vmem [shape: f32[1,16], index: 2, kind: input, shape index: {}]
  %s3 = inlined_call_operand.vmem [shape: f32[9,16,64], index: 3, kind: input, shape index: {}]
  %s4 = inlined_call_operand.vmem [shape: f32[1,64], index: 4, kind: input, shape index: {}]
  %s5 = inlined_call_operand.hbm [shape: f32[64,128], index: 5, kind: input, shape index: {}]
  %s6 = inlined_call_operand.vmem [shape: f32[1,128], index: 6, kind: input, shape index: {}]
  %s7 = inlined_call_operand.vmem [shape: f32[8,128], index: 7, kind: input, shape index: {}]
  %s8 = inlined_call_operand.hbm [shape: f32[8,128], index: 8, kind: output, shape index: {}]
  %s9 = sld [smem:[#allocation0]]
  $region46: #{tpu_custom_call.1} parent=0
    _
  %s11 = ssub.s32 1, %s9
  %s12 = scalar_select 0, %s11, %s9
  $region1: #{tpu_custom_call.1} parent=0
    #allocation2 [shape = 'u8[32768]{0}', space=vmem, size = 0x8000, scoped, tag = 'input window, operand 5, single buffered']
    #allocation3 [shape = 's32[1]{0}', space=sflag, size = 0x4, scoped, tag = 'scoped memory for tpu_custom_call.1']
    #allocation4 [shape = 's32[1]{0}', space=sflag, size = 0x4, scoped, tag = 'scoped memory for tpu_custom_call.1']
    #allocation5 [shape = 'u8[4096]{0}', space=vmem, size = 0x1000, scoped, tag = 'output window, operand 0, single buffered']
    %13 = vsyncpa [#allocation3], 0
    %14 = vsyncpa [#allocation4], 0
    // Predicated region
    $region2: #{tpu_custom_call.1} parent=1 // pred_check
      _
    $region3: #{tpu_custom_call.1} parent=1 // pred_check_branch
      %16 = sbr.rel (0) target = $region5
    $region4: #{tpu_custom_call.1} parent=1 // pred_region
      _
    $region5: #{tpu_custom_call.1} parent=1 // pred_fallthru
      _
    // Predicated region
    $region6: #{tpu_custom_call.1} parent=1 // pred_check
      _
    $region7: #{tpu_custom_call.1} parent=1 // pred_check_branch
      %18 = sbr.rel (0) target = $region9
    $region8: #{tpu_custom_call.1} parent=1 // pred_region
      _
    $region9: #{tpu_custom_call.1} parent=1 // pred_fallthru
      _
    // Predicated region
    $region10: #{tpu_custom_call.1} parent=1 // pred_check
      _
    $region11: #{tpu_custom_call.1} parent=1 // pred_check_branch
      %20 = sbr.rel (0) target = $region13
    $region12: #{tpu_custom_call.1} parent=1 // pred_region
      _
    $region13: #{tpu_custom_call.1} parent=1 // pred_fallthru
      _
    // Predicated region
    $region14: #{tpu_custom_call.1} parent=1 // pred_check
      _
    $region15: #{tpu_custom_call.1} parent=1 // pred_check_branch
      %22 = sbr.rel (0) target = $region17
    $region16: #{tpu_custom_call.1} parent=1 // pred_region
      _
    $region17: #{tpu_custom_call.1} parent=1 // pred_fallthru
      _
    // Predicated region
    $region18: #{tpu_custom_call.1} parent=1 // pred_check
      _
    $region19: #{tpu_custom_call.1} parent=1 // pred_check_branch
      %24 = sbr.rel (0) target = $region21
    $region20: #{tpu_custom_call.1} parent=1 // pred_region
      _
    $region21: #{tpu_custom_call.1} parent=1 // pred_fallthru
      _
    // Predicated region
    $region22: #{tpu_custom_call.1} parent=1 // pred_check
      _
    $region23: #{tpu_custom_call.1} parent=1 // pred_check_branch
      %26 = sbr.rel (0) target = $region25
    $region24: #{tpu_custom_call.1} parent=1 // pred_region
      %28 = vsyncadd [#allocation3], 0
      %s29 = sshll.u32 %s5, 4
      %s30 = int_to_ptr.hbm [resolvable:$true] %s29
      %s31 = sshll.u32 [#allocation2], 4
      %s32 = int_to_ptr.vmem [resolvable:$true] %s31
      %37 = dma.hbm_to_vmem [thread:$0]  %s30, 1024, %s32, [#allocation3], 128, 128, 8
    $region25: #{tpu_custom_call.1} parent=1 // pred_fallthru
      _
    // Predicated region
    $region26: #{tpu_custom_call.1} parent=1 // pred_check
      _
    $region27: #{tpu_custom_call.1} parent=1 // pred_check_branch
      %39 = sbr.rel (0) target = $region29
    $region28: #{tpu_custom_call.1} parent=1 // pred_region
      _
    $region29: #{tpu_custom_call.1} parent=1 // pred_fallthru
      _
    // Predicated region
    $region30: #{tpu_custom_call.1} parent=1 // pred_check
      _
    $region31: #{tpu_custom_call.1} parent=1 // pred_check_branch
      %41 = sbr.rel (0) target = $region33
    $region32: #{tpu_custom_call.1} parent=1 // pred_region
      _
    $region33: #{tpu_custom_call.1} parent=1 // pred_fallthru
      _
    // Predicated region
    $region34: #{tpu_custom_call.1} parent=1 // pred_check
      _
    $region35: #{tpu_custom_call.1} parent=1 // pred_check_branch
      %43 = sbr.rel (0) target = $region37
    $region36: #{tpu_custom_call.1} parent=1 // pred_region
      %45 = dma.done [#allocation3], 1024
    $region37: #{tpu_custom_call.1} parent=1 // pred_fallthru
      _
    %v46 = vld [vmem:[%s0] sm:$0xff]
    %v47 = vld [vmem:[%s0 + $0x8] sm:$0xff]
    %v48 = vld [vmem:[%s1] sm:$0xff]
    %v49 = vld [vmem:[%s1 + $0x8] sm:$0xff]
    %v50 = vld [vmem:[%s1 + $0x10] sm:$0xff]
    %v51 = vld [vmem:[%s1 + $0x18] sm:$0xff]
    %v52 = vld [vmem:[%s1 + $0x20] sm:$0xff]
    %v53 = vld [vmem:[%s1 + $0x28] sm:$0xff]
    %v54 = vld [vmem:[%s1 + $0x30] sm:$0xff]
    %v55 = vld [vmem:[%s1 + $0x38] sm:$0xff]
    %v56 = vld [vmem:[%s1 + $0x40] sm:$0xff]
    %v57 = vld [vmem:[%s1 + $0x48] sm:$0xff]
    %v58 = vld [vmem:[%s1 + $0x50] sm:$0xff]
    %v59 = vld [vmem:[%s1 + $0x58] sm:$0xff]
    %v60 = vld [vmem:[%s1 + $0x60] sm:$0xff]
    %v61 = vld [vmem:[%s1 + $0x68] sm:$0xff]
    %v62 = vld [vmem:[%s2] sm:$0x1]
    %vm63 = vcmask 916480
    %v65 = vsel %vm63, %v46, 0
    %67 = vmatpush.msra.mxu0 0.0
    %68 = vmatpush.msra.mxu0 0.0
    %69 = vmatpush.msra.mxu0 %v61
    %70 = vmatpush.msra.mxu0 %v60
    %71 = vmatpush.msra.mxu0 %v59
    %72 = vmatpush.msra.mxu0 %v58
    %73 = vmatpush.msra.mxu0 %v57
    %74 = vmatpush.msra.mxu0 %v56
    %75 = vmatpush.msra.mxu0 %v55
    %76 = vmatpush.msra.mxu0 %v54
    %77 = vmatpush.msra.mxu0 %v53
    %78 = vmatpush.msra.mxu0 %v52
    %79 = vmatpush.msra.mxu0 %v51
    %80 = vmatpush.msra.mxu0 %v50
    %81 = vmatpush.msra.mxu0 %v49
    %82 = vmatpush.msra.mxu0 %v48
    %83 = vmatmul.f32.gmra.mxu0 %v65
    %v84 = vpop.f32.mrf.mxu0
    %v85 = vadd.f32 0.0, %v84
    %86 = vdwg.mxu0
    %88 = vrot.lane.b32.xlu0 %v85, 112
    %v89 = vpop.permute.xlu0 %88
    %v91 = vmax.f32 %v85, %v89
    %93 = vrot.lane.b32.xlu0 %v91, 96
    %v94 = vpop.permute.xlu0 %93
    %v96 = vmax.f32 %v91, %v94
    %v98 = vperm.slane %v62, 0
    %v100 = vadd.f32 %v96, %v98
    %v101 = vmax.f32 %v100, 0.0
    %v102 = vld [vmem:[%s3] sm:$0xff]
    %v103 = vld [vmem:[%s3 + $0x8] sm:$0xff]
    %104 = vrot.lane.b32.xlu0 %v46, 120
    %v105 = vpop.permute.xlu0 %104
    %v106 = vsel %vm63, %v105, 0
    %108 = vmatpush.msra.mxu0 0.0
    %109 = vmatpush.msra.mxu0 0.0
    %110 = vmatpush.msra.mxu0 %v61
    %111 = vmatpush.msra.mxu0 %v60
    %112 = vmatpush.msra.mxu0 %v59
    %113 = vmatpush.msra.mxu0 %v58
    %114 = vmatpush.msra.mxu0 %v57
    %115 = vmatpush.msra.mxu0 %v56
    %116 = vmatpush.msra.mxu0 %v55
    %117 = vmatpush.msra.mxu0 %v54
    %118 = vmatpush.msra.mxu0 %v53
    %119 = vmatpush.msra.mxu0 %v52
    %120 = vmatpush.msra.mxu0 %v51
    %121 = vmatpush.msra.mxu0 %v50
    %122 = vmatpush.msra.mxu0 %v49
    %123 = vmatpush.msra.mxu0 %v48
    %124 = vmatmul.f32.gmra.mxu0 %v106
    %v125 = vpop.f32.mrf.mxu0
    %v126 = vadd.f32 0.0, %v125
    %127 = vdwg.mxu0
    %129 = vrot.lane.b32.xlu0 %v126, 112
    %v130 = vpop.permute.xlu0 %129
    %v132 = vmax.f32 %v126, %v130
    %134 = vrot.lane.b32.xlu0 %v132, 96
    %v135 = vpop.permute.xlu0 %134
    %v137 = vmax.f32 %v132, %v135
    %v138 = vadd.f32 %v137, %v98
    %v139 = vmax.f32 %v138, 0.0
    %s140 = scalar_lea.vmem %s3, 16
    %v141 = vld [vmem:[%s140] sm:$0xff]
    %v142 = vld [vmem:[%s140 + $0x8] sm:$0xff]
    %vm143 = vcmask 130048
    %v145 = vsel %vm143, %v139, 0
    %147 = vmatpush.msra.mxu0 0.0
    %148 = vmatpush.msra.mxu0 0.0
    %149 = vmatpush.msra.mxu0 0.0
    %150 = vmatpush.msra.mxu0 0.0
    %151 = vmatpush.msra.mxu0 0.0
    %152 = vmatpush.msra.mxu0 0.0
    %153 = vmatpush.msra.mxu0 0.0
    %154 = vmatpush.msra.mxu0 0.0
    %155 = vmatpush.msra.mxu0 0.0
    %156 = vmatpush.msra.mxu0 0.0
    %157 = vmatpush.msra.mxu0 0.0
    %158 = vmatpush.msra.mxu0 0.0
    %159 = vmatpush.msra.mxu0 0.0
    %160 = vmatpush.msra.mxu0 0.0
    %161 = vmatpush.msra.mxu0 %v142
    %162 = vmatpush.msra.mxu0 %v141
    %163 = vmatmul.f32.gmra.mxu0 %v145
    %v164 = vpop.f32.mrf.mxu0
    %v165 = vadd.f32 0.0, %v164
    %166 = vdwg.mxu0
    %v168 = vsel %vm143, %v101, 0
    %170 = vmatpush.msra.mxu0 0.0
    %171 = vmatpush.msra.mxu0 0.0
    %172 = vmatpush.msra.mxu0 0.0
    %173 = vmatpush.msra.mxu0 0.0
    %174 = vmatpush.msra.mxu0 0.0
    %175 = vmatpush.msra.mxu0 0.0
    %176 = vmatpush.msra.mxu0 0.0
    %177 = vmatpush.msra.mxu0 0.0
    %178 = vmatpush.msra.mxu0 0.0
    %179 = vmatpush.msra.mxu0 0.0
    %180 = vmatpush.msra.mxu0 0.0
    %181 = vmatpush.msra.mxu0 0.0
    %182 = vmatpush.msra.mxu0 0.0
    %183 = vmatpush.msra.mxu0 0.0
    %184 = vmatpush.msra.mxu0 %v103
    %185 = vmatpush.msra.mxu0 %v102
    %186 = vmatmul.f32.gmra.mxu0 %v168
    %v187 = vpop.f32.mrf.mxu0
    %v188 = vadd.f32 %v165, %v187
    %189 = vdwg.mxu0
    %190 = vrot.lane.b32.xlu0 %v46, 112
    %v191 = vpop.permute.xlu0 %190
    %v192 = vsel %vm63, %v191, 0
    %194 = vmatpush.msra.mxu0 0.0
    %195 = vmatpush.msra.mxu0 0.0
    %196 = vmatpush.msra.mxu0 %v61
    %197 = vmatpush.msra.mxu0 %v60
    %198 = vmatpush.msra.mxu0 %v59
    %199 = vmatpush.msra.mxu0 %v58
    %200 = vmatpush.msra.mxu0 %v57
    %201 = vmatpush.msra.mxu0 %v56
    %202 = vmatpush.msra.mxu0 %v55
    %203 = vmatpush.msra.mxu0 %v54
    %204 = vmatpush.msra.mxu0 %v53
    %205 = vmatpush.msra.mxu0 %v52
    %206 = vmatpush.msra.mxu0 %v51
    %207 = vmatpush.msra.mxu0 %v50
    %208 = vmatpush.msra.mxu0 %v49
    %209 = vmatpush.msra.mxu0 %v48
    %210 = vmatmul.f32.gmra.mxu0 %v192
    %v211 = vpop.f32.mrf.mxu0
    %v212 = vadd.f32 0.0, %v211
    %213 = vdwg.mxu0
    %215 = vrot.lane.b32.xlu0 %v212, 112
    %v216 = vpop.permute.xlu0 %215
    %v218 = vmax.f32 %v212, %v216
    %220 = vrot.lane.b32.xlu0 %v218, 96
    %v221 = vpop.permute.xlu0 %220
    %v223 = vmax.f32 %v218, %v221
    %v224 = vadd.f32 %v223, %v98
    %v225 = vmax.f32 %v224, 0.0
    %s226 = scalar_lea.vmem %s3, 32
    %v227 = vld [vmem:[%s226] sm:$0xff]
    %v228 = vld [vmem:[%s226 + $0x8] sm:$0xff]
    %v230 = vsel %vm143, %v225, 0
    %232 = vmatpush.msra.mxu0 0.0
    %233 = vmatpush.msra.mxu0 0.0
    %234 = vmatpush.msra.mxu0 0.0
    %235 = vmatpush.msra.mxu0 0.0
    %236 = vmatpush.msra.mxu0 0.0
    %237 = vmatpush.msra.mxu0 0.0
    %238 = vmatpush.msra.mxu0 0.0
    %239 = vmatpush.msra.mxu0 0.0
    %240 = vmatpush.msra.mxu0 0.0
    %241 = vmatpush.msra.mxu0 0.0
    %242 = vmatpush.msra.mxu0 0.0
    %243 = vmatpush.msra.mxu0 0.0
    %244 = vmatpush.msra.mxu0 0.0
    %245 = vmatpush.msra.mxu0 0.0
    %246 = vmatpush.msra.mxu0 %v228
    %247 = vmatpush.msra.mxu0 %v227
    %248 = vmatmul.f32.gmra.mxu0 %v230
    %v249 = vpop.f32.mrf.mxu0
    %v250 = vadd.f32 0.0, %v249
    %251 = vdwg.mxu0
    %v252 = vadd.f32 %v188, %v250
    %254 = vrot.lane.b32.xlu0 %v46, 64
    %v255 = vpop.permute.xlu0 %254
    %256 = vrot.lane.b32.xlu0 %v47, 64
    %v257 = vpop.permute.xlu0 %256
    %vm258 = vcmask 523264
    %v259 = vsel %vm258, %v255, %v257
    %v260 = vsel %vm63, %v259, 0
    %262 = vmatpush.msra.mxu0 0.0
    %263 = vmatpush.msra.mxu0 0.0
    %264 = vmatpush.msra.mxu0 %v61
    %265 = vmatpush.msra.mxu0 %v60
    %266 = vmatpush.msra.mxu0 %v59
    %267 = vmatpush.msra.mxu0 %v58
    %268 = vmatpush.msra.mxu0 %v57
    %269 = vmatpush.msra.mxu0 %v56
    %270 = vmatpush.msra.mxu0 %v55
    %271 = vmatpush.msra.mxu0 %v54
    %272 = vmatpush.msra.mxu0 %v53
    %273 = vmatpush.msra.mxu0 %v52
    %274 = vmatpush.msra.mxu0 %v51
    %275 = vmatpush.msra.mxu0 %v50
    %276 = vmatpush.msra.mxu0 %v49
    %277 = vmatpush.msra.mxu0 %v48
    %278 = vmatmul.f32.gmra.mxu0 %v260
    %v279 = vpop.f32.mrf.mxu0
    %v280 = vadd.f32 0.0, %v279
    %281 = vdwg.mxu0
    %283 = vrot.lane.b32.xlu0 %v280, 112
    %v284 = vpop.permute.xlu0 %283
    %v286 = vmax.f32 %v280, %v284
    %288 = vrot.lane.b32.xlu0 %v286, 96
    %v289 = vpop.permute.xlu0 %288
    %v291 = vmax.f32 %v286, %v289
    %v292 = vadd.f32 %v291, %v98
    %v293 = vmax.f32 %v292, 0.0
    %s294 = scalar_lea.vmem %s3, 48
    %v295 = vld [vmem:[%s294] sm:$0xff]
    %v296 = vld [vmem:[%s294 + $0x8] sm:$0xff]
    %v298 = vsel %vm143, %v293, 0
    %300 = vmatpush.msra.mxu0 0.0
    %301 = vmatpush.msra.mxu0 0.0
    %302 = vmatpush.msra.mxu0 0.0
    %303 = vmatpush.msra.mxu0 0.0
    %304 = vmatpush.msra.mxu0 0.0
    %305 = vmatpush.msra.mxu0 0.0
    %306 = vmatpush.msra.mxu0 0.0
    %307 = vmatpush.msra.mxu0 0.0
    %308 = vmatpush.msra.mxu0 0.0
    %309 = vmatpush.msra.mxu0 0.0
    %310 = vmatpush.msra.mxu0 0.0
    %311 = vmatpush.msra.mxu0 0.0
    %312 = vmatpush.msra.mxu0 0.0
    %313 = vmatpush.msra.mxu0 0.0
    %314 = vmatpush.msra.mxu0 %v296
    %315 = vmatpush.msra.mxu0 %v295
    %316 = vmatmul.f32.gmra.mxu0 %v298
    %v317 = vpop.f32.mrf.mxu0
    %v318 = vadd.f32 0.0, %v317
    %319 = vdwg.mxu0
    %v320 = vadd.f32 %v252, %v318
    %321 = vrot.lane.b32.xlu0 %v46, 56
    %v322 = vpop.permute.xlu0 %321
    %323 = vrot.lane.b32.xlu0 %v47, 56
    %v324 = vpop.permute.xlu0 %323
    %vm325 = vcmask 457728
    %v326 = vsel %vm325, %v322, %v324
    %v327 = vsel %vm63, %v326, 0
    %329 = vmatpush.msra.mxu0 0.0
    %330 = vmatpush.msra.mxu0 0.0
    %331 = vmatpush.msra.mxu0 %v61
    %332 = vmatpush.msra.mxu0 %v60
    %333 = vmatpush.msra.mxu0 %v59
    %334 = vmatpush.msra.mxu0 %v58
    %335 = vmatpush.msra.mxu0 %v57
    %336 = vmatpush.msra.mxu0 %v56
    %337 = vmatpush.msra.mxu0 %v55
    %338 = vmatpush.msra.mxu0 %v54
    %339 = vmatpush.msra.mxu0 %v53
    %340 = vmatpush.msra.mxu0 %v52
    %341 = vmatpush.msra.mxu0 %v51
    %342 = vmatpush.msra.mxu0 %v50
    %343 = vmatpush.msra.mxu0 %v49
    %344 = vmatpush.msra.mxu0 %v48
    %345 = vmatmul.f32.gmra.mxu0 %v327
    %v346 = vpop.f32.mrf.mxu0
    %v347 = vadd.f32 0.0, %v346
    %348 = vdwg.mxu0
    %350 = vrot.lane.b32.xlu0 %v347, 112
    %v351 = vpop.permute.xlu0 %350
    %v353 = vmax.f32 %v347, %v351
    %355 = vrot.lane.b32.xlu0 %v353, 96
    %v356 = vpop.permute.xlu0 %355
    %v358 = vmax.f32 %v353, %v356
    %v359 = vadd.f32 %v358, %v98
    %v360 = vmax.f32 %v359, 0.0
    %s361 = scalar_lea.vmem %s3, 64
    %v362 = vld [vmem:[%s361] sm:$0xff]
    %v363 = vld [vmem:[%s361 + $0x8] sm:$0xff]
    %v365 = vsel %vm143, %v360, 0
    %367 = vmatpush.msra.mxu0 0.0
    %368 = vmatpush.msra.mxu0 0.0
    %369 = vmatpush.msra.mxu0 0.0
    %370 = vmatpush.msra.mxu0 0.0
    %371 = vmatpush.msra.mxu0 0.0
    %372 = vmatpush.msra.mxu0 0.0
    %373 = vmatpush.msra.mxu0 0.0
    %374 = vmatpush.msra.mxu0 0.0
    %375 = vmatpush.msra.mxu0 0.0
    %376 = vmatpush.msra.mxu0 0.0
    %377 = vmatpush.msra.mxu0 0.0
    %378 = vmatpush.msra.mxu0 0.0
    %379 = vmatpush.msra.mxu0 0.0
    %380 = vmatpush.msra.mxu0 0.0
    %381 = vmatpush.msra.mxu0 %v363
    %382 = vmatpush.msra.mxu0 %v362
    %383 = vmatmul.f32.gmra.mxu0 %v365
    %v384 = vpop.f32.mrf.mxu0
    %v385 = vadd.f32 0.0, %v384
    %386 = vdwg.mxu0
    %v387 = vadd.f32 %v320, %v385
    %388 = vrot.lane.b32.xlu0 %v46, 48
    %v389 = vpop.permute.xlu0 %388
    %390 = vrot.lane.b32.xlu0 %v47, 48
    %v391 = vpop.permute.xlu0 %390
    %vm392 = vcmask 392192
    %v393 = vsel %vm392, %v389, %v391
    %v394 = vsel %vm63, %v393, 0
    %396 = vmatpush.msra.mxu0 0.0
    %397 = vmatpush.msra.mxu0 0.0
    %398 = vmatpush.msra.mxu0 %v61
    %399 = vmatpush.msra.mxu0 %v60
    %400 = vmatpush.msra.mxu0 %v59
    %401 = vmatpush.msra.mxu0 %v58
    %402 = vmatpush.msra.mxu0 %v57
    %403 = vmatpush.msra.mxu0 %v56
    %404 = vmatpush.msra.mxu0 %v55
    %405 = vmatpush.msra.mxu0 %v54
    %406 = vmatpush.msra.mxu0 %v53
    %407 = vmatpush.msra.mxu0 %v52
    %408 = vmatpush.msra.mxu0 %v51
    %409 = vmatpush.msra.mxu0 %v50
    %410 = vmatpush.msra.mxu0 %v49
    %411 = vmatpush.msra.mxu0 %v48
    %412 = vmatmul.f32.gmra.mxu0 %v394
    %v413 = vpop.f32.mrf.mxu0
    %v414 = vadd.f32 0.0, %v413
    %415 = vdwg.mxu0
    %417 = vrot.lane.b32.xlu0 %v414, 112
    %v418 = vpop.permute.xlu0 %417
    %v420 = vmax.f32 %v414, %v418
    %422 = vrot.lane.b32.xlu0 %v420, 96
    %v423 = vpop.permute.xlu0 %422
    %v425 = vmax.f32 %v420, %v423
    %v426 = vadd.f32 %v425, %v98
    %v427 = vmax.f32 %v426, 0.0
    %s428 = scalar_lea.vmem %s3, 80
    %v429 = vld [vmem:[%s428] sm:$0xff]
    %v430 = vld [vmem:[%s428 + $0x8] sm:$0xff]
    %v432 = vsel %vm143, %v427, 0
    %434 = vmatpush.msra.mxu0 0.0
    %435 = vmatpush.msra.mxu0 0.0
    %436 = vmatpush.msra.mxu0 0.0
    %437 = vmatpush.msra.mxu0 0.0
    %438 = vmatpush.msra.mxu0 0.0
    %439 = vmatpush.msra.mxu0 0.0
    %440 = vmatpush.msra.mxu0 0.0
    %441 = vmatpush.msra.mxu0 0.0
    %442 = vmatpush.msra.mxu0 0.0
    %443 = vmatpush.msra.mxu0 0.0
    %444 = vmatpush.msra.mxu0 0.0
    %445 = vmatpush.msra.mxu0 0.0
    %446 = vmatpush.msra.mxu0 0.0
    %447 = vmatpush.msra.mxu0 0.0
    %448 = vmatpush.msra.mxu0 %v430
    %449 = vmatpush.msra.mxu0 %v429
    %450 = vmatmul.f32.gmra.mxu0 %v432
    %v451 = vpop.f32.mrf.mxu0
    %v452 = vadd.f32 0.0, %v451
    %453 = vdwg.mxu0
    %v454 = vadd.f32 %v387, %v452
    %v455 = vsel %vm63, %v47, 0
    %457 = vmatpush.msra.mxu0 0.0
    %458 = vmatpush.msra.mxu0 0.0
    %459 = vmatpush.msra.mxu0 %v61
    %460 = vmatpush.msra.mxu0 %v60
    %461 = vmatpush.msra.mxu0 %v59
    %462 = vmatpush.msra.mxu0 %v58
    %463 = vmatpush.msra.mxu0 %v57
    %464 = vmatpush.msra.mxu0 %v56
    %465 = vmatpush.msra.mxu0 %v55
    %466 = vmatpush.msra.mxu0 %v54
    %467 = vmatpush.msra.mxu0 %v53
    %468 = vmatpush.msra.mxu0 %v52
    %469 = vmatpush.msra.mxu0 %v51
    %470 = vmatpush.msra.mxu0 %v50
    %471 = vmatpush.msra.mxu0 %v49
    %472 = vmatpush.msra.mxu0 %v48
    %473 = vmatmul.f32.gmra.mxu0 %v455
    %v474 = vpop.f32.mrf.mxu0
    %v475 = vadd.f32 0.0, %v474
    %476 = vdwg.mxu0
    %478 = vrot.lane.b32.xlu0 %v475, 112
    %v479 = vpop.permute.xlu0 %478
    %v481 = vmax.f32 %v475, %v479
    %483 = vrot.lane.b32.xlu0 %v481, 96
    %v484 = vpop.permute.xlu0 %483
    %v486 = vmax.f32 %v481, %v484
    %v487 = vadd.f32 %v486, %v98
    %v488 = vmax.f32 %v487, 0.0
    %s489 = scalar_lea.vmem %s3, 96
    %v490 = vld [vmem:[%s489] sm:$0xff]
    %v491 = vld [vmem:[%s489 + $0x8] sm:$0xff]
    %v493 = vsel %vm143, %v488, 0
    %495 = vmatpush.msra.mxu0 0.0
    %496 = vmatpush.msra.mxu0 0.0
    %497 = vmatpush.msra.mxu0 0.0
    %498 = vmatpush.msra.mxu0 0.0
    %499 = vmatpush.msra.mxu0 0.0
    %500 = vmatpush.msra.mxu0 0.0
    %501 = vmatpush.msra.mxu0 0.0
    %502 = vmatpush.msra.mxu0 0.0
    %503 = vmatpush.msra.mxu0 0.0
    %504 = vmatpush.msra.mxu0 0.0
    %505 = vmatpush.msra.mxu0 0.0
    %506 = vmatpush.msra.mxu0 0.0
    %507 = vmatpush.msra.mxu0 0.0
    %508 = vmatpush.msra.mxu0 0.0
    %509 = vmatpush.msra.mxu0 %v491
    %510 = vmatpush.msra.mxu0 %v490
    %511 = vmatmul.f32.gmra.mxu0 %v493
    %v512 = vpop.f32.mrf.mxu0
    %v513 = vadd.f32 0.0, %v512
    %514 = vdwg.mxu0
    %v515 = vadd.f32 %v454, %v513
    %516 = vrot.lane.b32.xlu0 %v47, 120
    %v517 = vpop.permute.xlu0 %516
    %v518 = vsel %vm63, %v517, 0
    %520 = vmatpush.msra.mxu0 0.0
    %521 = vmatpush.msra.mxu0 0.0
    %522 = vmatpush.msra.mxu0 %v61
    %523 = vmatpush.msra.mxu0 %v60
    %524 = vmatpush.msra.mxu0 %v59
    %525 = vmatpush.msra.mxu0 %v58
    %526 = vmatpush.msra.mxu0 %v57
    %527 = vmatpush.msra.mxu0 %v56
    %528 = vmatpush.msra.mxu0 %v55
    %529 = vmatpush.msra.mxu0 %v54
    %530 = vmatpush.msra.mxu0 %v53
    %531 = vmatpush.msra.mxu0 %v52
    %532 = vmatpush.msra.mxu0 %v51
    %533 = vmatpush.msra.mxu0 %v50
    %534 = vmatpush.msra.mxu0 %v49
    %535 = vmatpush.msra.mxu0 %v48
    %536 = vmatmul.f32.gmra.mxu0 %v518
    %v537 = vpop.f32.mrf.mxu0
    %v538 = vadd.f32 0.0, %v537
    %539 = vdwg.mxu0
    %541 = vrot.lane.b32.xlu0 %v538, 112
    %v542 = vpop.permute.xlu0 %541
    %v544 = vmax.f32 %v538, %v542
    %546 = vrot.lane.b32.xlu0 %v544, 96
    %v547 = vpop.permute.xlu0 %546
    %v549 = vmax.f32 %v544, %v547
    %v550 = vadd.f32 %v549, %v98
    %v551 = vmax.f32 %v550, 0.0
    %s552 = scalar_lea.vmem %s3, 112
    %v553 = vld [vmem:[%s552] sm:$0xff]
    %v554 = vld [vmem:[%s552 + $0x8] sm:$0xff]
    %v556 = vsel %vm143, %v551, 0
    %558 = vmatpush.msra.mxu0 0.0
    %559 = vmatpush.msra.mxu0 0.0
    %560 = vmatpush.msra.mxu0 0.0
    %561 = vmatpush.msra.mxu0 0.0
    %562 = vmatpush.msra.mxu0 0.0
    %563 = vmatpush.msra.mxu0 0.0
    %564 = vmatpush.msra.mxu0 0.0
    %565 = vmatpush.msra.mxu0 0.0
    %566 = vmatpush.msra.mxu0 0.0
    %567 = vmatpush.msra.mxu0 0.0
    %568 = vmatpush.msra.mxu0 0.0
    %569 = vmatpush.msra.mxu0 0.0
    %570 = vmatpush.msra.mxu0 0.0
    %571 = vmatpush.msra.mxu0 0.0
    %572 = vmatpush.msra.mxu0 %v554
    %573 = vmatpush.msra.mxu0 %v553
    %574 = vmatmul.f32.gmra.mxu0 %v556
    %v575 = vpop.f32.mrf.mxu0
    %v576 = vadd.f32 0.0, %v575
    %577 = vdwg.mxu0
    %v578 = vadd.f32 %v515, %v576
    %579 = vrot.lane.b32.xlu0 %v47, 112
    %v580 = vpop.permute.xlu0 %579
    %v581 = vsel %vm63, %v580, 0
    %583 = vmatpush.msra.mxu0 0.0
    %584 = vmatpush.msra.mxu0 0.0
    %585 = vmatpush.msra.mxu0 %v61
    %586 = vmatpush.msra.mxu0 %v60
    %587 = vmatpush.msra.mxu0 %v59
    %588 = vmatpush.msra.mxu0 %v58
    %589 = vmatpush.msra.mxu0 %v57
    %590 = vmatpush.msra.mxu0 %v56
    %591 = vmatpush.msra.mxu0 %v55
    %592 = vmatpush.msra.mxu0 %v54
    %593 = vmatpush.msra.mxu0 %v53
    %594 = vmatpush.msra.mxu0 %v52
    %595 = vmatpush.msra.mxu0 %v51
    %596 = vmatpush.msra.mxu0 %v50
    %597 = vmatpush.msra.mxu0 %v49
    %598 = vmatpush.msra.mxu0 %v48
    %599 = vmatmul.f32.gmra.mxu0 %v581
    %v600 = vpop.f32.mrf.mxu0
    %v601 = vadd.f32 0.0, %v600
    %602 = vdwg.mxu0
    %604 = vrot.lane.b32.xlu0 %v601, 112
    %v605 = vpop.permute.xlu0 %604
    %v607 = vmax.f32 %v601, %v605
    %609 = vrot.lane.b32.xlu0 %v607, 96
    %v610 = vpop.permute.xlu0 %609
    %v612 = vmax.f32 %v607, %v610
    %v613 = vadd.f32 %v612, %v98
    %v614 = vmax.f32 %v613, 0.0
    %s615 = scalar_lea.vmem %s3, 128
    %v616 = vld [vmem:[%s615] sm:$0xff]
    %v617 = vld [vmem:[%s615 + $0x8] sm:$0xff]
    %v619 = vsel %vm143, %v614, 0
    %621 = vmatpush.msra.mxu0 0.0
    %622 = vmatpush.msra.mxu0 0.0
    %623 = vmatpush.msra.mxu0 0.0
    %624 = vmatpush.msra.mxu0 0.0
    %625 = vmatpush.msra.mxu0 0.0
    %626 = vmatpush.msra.mxu0 0.0
    %627 = vmatpush.msra.mxu0 0.0
    %628 = vmatpush.msra.mxu0 0.0
    %629 = vmatpush.msra.mxu0 0.0
    %630 = vmatpush.msra.mxu0 0.0
    %631 = vmatpush.msra.mxu0 0.0
    %632 = vmatpush.msra.mxu0 0.0
    %633 = vmatpush.msra.mxu0 0.0
    %634 = vmatpush.msra.mxu0 0.0
    %635 = vmatpush.msra.mxu0 %v617
    %636 = vmatpush.msra.mxu0 %v616
    %637 = vmatmul.f32.gmra.mxu0 %v619
    %v638 = vpop.f32.mrf.mxu0
    %v639 = vadd.f32 0.0, %v638
    %640 = vdwg.mxu0
    %v641 = vadd.f32 %v578, %v639
    %v642 = vld [vmem:[%s4] sm:$0x1]
    %v644 = vperm.slane %v642, 0
    %v646 = vadd.f32 %v641, %v644
    %v647 = vmax.f32 %v646, 0.0
    %v648 = vld [vmem:[#allocation2] sm:$0xff]
    %v649 = vld [vmem:[#allocation2 + $0x8] sm:$0xff]
    %v650 = vld [vmem:[#allocation2 + $0x10] sm:$0xff]
    %v651 = vld [vmem:[#allocation2 + $0x18] sm:$0xff]
    %v652 = vld [vmem:[#allocation2 + $0x20] sm:$0xff]
    %v653 = vld [vmem:[#allocation2 + $0x28] sm:$0xff]
    %v654 = vld [vmem:[#allocation2 + $0x30] sm:$0xff]
    %v655 = vld [vmem:[#allocation2 + $0x38] sm:$0xff]
    %v656 = vld [vmem:[%s6] sm:$0x1]
    %v658 = vperm.slane %v656, 0
    %v661 = vsel %vm258, %v647, 0
    %663 = vmatpush.msra.mxu0 0.0
    %664 = vmatpush.msra.mxu0 0.0
    %665 = vmatpush.msra.mxu0 0.0
    %666 = vmatpush.msra.mxu0 0.0
    %667 = vmatpush.msra.mxu0 0.0
    %668 = vmatpush.msra.mxu0 0.0
    %669 = vmatpush.msra.mxu0 0.0
    %670 = vmatpush.msra.mxu0 0.0
    %671 = vmatpush.msra.mxu0 %v655
    %672 = vmatpush.msra.mxu0 %v654
    %673 = vmatpush.msra.mxu0 %v653
    %674 = vmatpush.msra.mxu0 %v652
    %675 = vmatpush.msra.mxu0 %v651
    %676 = vmatpush.msra.mxu0 %v650
    %677 = vmatpush.msra.mxu0 %v649
    %678 = vmatpush.msra.mxu0 %v648
    %679 = vmatmul.f32.gmra.mxu0 %v661
    %v680 = vpop.f32.mrf.mxu0
    %v681 = vadd.f32 %v658, %v680
    %682 = vdwg.mxu0
    %v683 = vld [vmem:[%s7] sm:$0xff]
    %v684 = vsub.f32 1.0, %v683
    %v685 = vmul.f32 %v684, 1e+08
    %v686 = vsub.f32 %v681, %v685
    %687 = vst [vmem:[#allocation5] sm:$0xff] %v686
    // Predicated region
    $region38: #{tpu_custom_call.1} parent=1 // pred_check
      _
    $region39: #{tpu_custom_call.1} parent=1 // pred_check_branch
      %689 = sbr.rel (0) target = $region41
    $region40: #{tpu_custom_call.1} parent=1 // pred_region
      %691 = vsyncadd [#allocation4], 0
      %s693 = sshll.u32 [#allocation5], 4
      %s694 = int_to_ptr.vmem [resolvable:$true] %s693
      %s695 = sshll.u32 %s8, 4
      %s696 = int_to_ptr.hbm [resolvable:$true] %s695
      %698 = dma.vmem_to_hbm [thread:$0]  %s694, 128, %s696, [#allocation4]
    $region41: #{tpu_custom_call.1} parent=1 // pred_fallthru
      _
    // Predicated region
    $region42: #{tpu_custom_call.1} parent=1 // pred_check
      _
    $region43: #{tpu_custom_call.1} parent=1 // pred_check_branch
      %700 = sbr.rel (0) target = $region45
    $region44: #{tpu_custom_call.1} parent=1 // pred_region
      %702 = dma.done [#allocation4], 128
    $region45: #{tpu_custom_call.1} parent=1 // pred_fallthru
      _
    %703 = vsyncpa [#allocation3], 1
    %704 = vsyncpa [#allocation4], 1

</llo_original>
